<compile_context>
chip_gen: v6e
topology: v6e:2x2x1
jax: 0.10.0
libtpu: 0.0.40
codegen_flags: <defaults>
</compile_context>

<pallas_src>
import math

import jax
import jax.numpy as jnp
from jax.experimental import pallas as pl
from jax.experimental.pallas import tpu as pltpu

NEG_SLOPE = 0.01  # nn.LeakyReLU() default


def _leaky_relu(x):
    return jnp.where(x > 0, x, NEG_SLOPE * x)


def _round_up(x, m):
    return ((x + m - 1) // m) * m


def res_block_kernel(x_ref, w1_ref, b1_ref, w2_ref, b2_ref, o_ref):
    x = x_ref[...]  # f32 activations tile (block_b, D_pad)

    # l1 on the MXU: bf16 inputs, f32 accumulation.
    h = jnp.dot(x.astype(w1_ref.dtype), w1_ref[...],
                preferred_element_type=jnp.float32)
    h = _leaky_relu(h + b1_ref[...])            # bias + activation in f32

    # l2 on the MXU: bf16 inputs, f32 accumulation.
    h = jnp.dot(h.astype(w2_ref.dtype), w2_ref[...],
                preferred_element_type=jnp.float32)
    h = _leaky_relu(h + b2_ref[...])

    # Residual add against the original (f32) x.
    o_ref[...] = (h + x).astype(o_ref.dtype)


def res_block_forward(x, w1, b1, w2, b2, *, block_b=256,
                      compute_dtype=jnp.bfloat16):
    """Fused res_block forward.

    x:  (B, D) activations.
    w1, w2: (D, D) PyTorch-layout Linear weights (out_features, in_features).
    b1, b2: (D,) biases.
    """
    B, D = x.shape
    f32 = jnp.float32

    # --- lane-dense padding of the feature dim (multiple of 128) -------------
    D_pad = _round_up(D, 128)

    # --- adaptive batch tile --------------------------------------------------
    b8 = _round_up(B, 8)
    if b8 >= 16:
        # Keep >=2 grid steps so v7x's two TensorCores both get work.
        half = _round_up((b8 + 1) // 2, 8)
        block_b_eff = min(block_b, half)
    else:
        block_b_eff = b8
    B_pad = _round_up(b8, block_b_eff)
    grid = (B_pad // block_b_eff,)

    # --- host-side prep: pad, transpose weights to (D_in, D_out), cast -------
    x_p = jnp.pad(x.astype(f32), ((0, B_pad - B), (0, D_pad - D)))

    def prep_w(w):
        wt = jnp.pad(w.astype(f32).T, ((0, D_pad - D), (0, D_pad - D)))
        return wt.astype(compute_dtype)

    def prep_b(b):
        return jnp.pad(b.astype(f32), (0, D_pad - D)).reshape(1, D_pad)

    w1_t = prep_w(w1)
    w2_t = prep_w(w2)
    b1_2d = prep_b(b1)
    b2_2d = prep_b(b2)

    # --- explicit VMEM budget (double-buffered tiles + resident weights) -----
    w_itemsize = jnp.dtype(compute_dtype).itemsize
    w_bytes = D_pad * D_pad * w_itemsize
    act_tile_bytes = block_b_eff * D_pad * 4          # f32 x tile / out tile
    bias_bytes = D_pad * 4
    vmem_budget = (2 * 2 * act_tile_bytes              # in + out, double-buffered
                   + 2 * 2 * w_bytes                   # two weights, double-buffered
                   + 2 * 2 * bias_bytes
                   + (4 << 20))                        # headroom
    vmem_limit = int(min(vmem_budget, 64 << 20))       # stay within v7x physical

    cost = pl.CostEstimate(
        flops=2 * 2 * B_pad * D_pad * D_pad,           # two DxD matmuls
        transcendentals=0,
        bytes_accessed=(B_pad * D_pad * 4              # x in (f32)
                        + 2 * w_bytes                  # weights (bf16)
                        + 2 * bias_bytes
                        + B_pad * D_pad * 4),          # out (f32)
    )

    out = pl.pallas_call(
        res_block_kernel,
        out_shape=jax.ShapeDtypeStruct((B_pad, D_pad), jnp.float32),
        grid_spec=pltpu.PrefetchScalarGridSpec(
            num_scalar_prefetch=0,
            grid=grid,
            in_specs=[
                pl.BlockSpec((block_b_eff, D_pad), lambda i: (i, 0)),  # x tile
                pl.BlockSpec((D_pad, D_pad), lambda i: (0, 0)),        # W1^T (resident)
                pl.BlockSpec((1, D_pad), lambda i: (0, 0)),            # b1
                pl.BlockSpec((D_pad, D_pad), lambda i: (0, 0)),        # W2^T (resident)
                pl.BlockSpec((1, D_pad), lambda i: (0, 0)),            # b2
            ],
            out_specs=pl.BlockSpec((block_b_eff, D_pad), lambda i: (i, 0)),
        ),
        compiler_params=pltpu.CompilerParams(
            dimension_semantics=("parallel",),
            vmem_limit_bytes=vmem_limit,
        ),
        cost_estimate=cost,
    )(x_p, w1_t, b1_2d, w2_t, b2_2d)

    return out[:B, :D].astype(x.dtype)


def init_linear_params(key, in_features, out_features):
    """Mimic torch.nn.Linear default init: U(-1/sqrt(in), 1/sqrt(in))."""
    kw, kb = jax.random.split(key)
    bound = 1.0 / math.sqrt(in_features)
    w = jax.random.uniform(kw, (out_features, in_features), jnp.float32,
                           minval=-bound, maxval=bound)
    b = jax.random.uniform(kb, (out_features,), jnp.float32,
                           minval=-bound, maxval=bound)
    return w, b


def reference_forward_f32(x, w1, b1, w2, b2):
    h = _leaky_relu(x @ w1.T + b1)
    h = _leaky_relu(h @ w2.T + b2)
    return h + x


def reference_forward_bf16(x, w1, b1, w2, b2):
    """Emulates the kernel: bf16 matmul inputs, f32 accumulation/elementwise."""
    f32 = jnp.float32

    def q(a):
        return a.astype(jnp.bfloat16).astype(f32)

    h = _leaky_relu(jnp.dot(q(x), q(w1).T) + b1)
    h = _leaky_relu(jnp.dot(q(h), q(w2).T) + b2)
    return h + x


def _run_case(key, B, D):
    kx, k1, k2 = jax.random.split(key, 3)
    x = jax.random.normal(kx, (B, D), jnp.float32)
    w1, b1 = init_linear_params(k1, D, D)
    w2, b2 = init_linear_params(k2, D, D)

    out = jax.block_until_ready(res_block_forward(x, w1, b1, w2, b2))
    assert out.shape == (B, D)

    ref_bf16 = reference_forward_bf16(x, w1, b1, w2, b2)
    ref_f32 = reference_forward_f32(x, w1, b1, w2, b2)
    assert jnp.allclose(out, ref_bf16, atol=1e-3, rtol=1e-3), \
        f"mismatch vs bf16-emulating reference (B={B}, D={D})"
    assert jnp.allclose(out, ref_f32, atol=5e-2, rtol=5e-2), \
        f"mismatch vs f32 reference (B={B}, D={D})"


if __name__ == "__main__":
    key = jax.random.PRNGKey(0)
    k_a, k_b = jax.random.split(key)

    # Small, aligned case (num_neurons-style square Linear).
    _run_case(k_a, B=8, D=256)
    # Unaligned case: exercises batch padding, D padding to 128, and a 2-step
    # parallel grid.
    _run_case(k_b, B=12, D=200)

    print("KERNEL_OK")
</pallas_src>

<mosaic_0001>
module attributes {stable_mosaic.version = 11 : i64} {
  func.func @res_block_kernel(%arg0: i32, %arg1: memref<8x256xf32, #tpu.memory_space<vmem>>, %arg2: memref<256x256xbf16, #tpu.memory_space<vmem>>, %arg3: memref<1x256xf32, #tpu.memory_space<vmem>>, %arg4: memref<256x256xbf16, #tpu.memory_space<vmem>>, %arg5: memref<1x256xf32, #tpu.memory_space<vmem>>, %arg6: memref<8x256xf32, #tpu.memory_space<vmem>>) attributes {dimension_semantics = [#tpu.dimension_semantics<parallel>], iteration_bounds = array<i64: 1>, scalar_prefetch = 0 : i64, scratch_operands = 0 : i64, tpu.core_type = #tpu.core_type<tc>, window_params = [{transform_indices = @transform_0, window_bounds = array<i64: 8, 256>}, {pipeline_mode = #tpu.pipeline_mode<synchronous>, transform_indices = @transform_1, window_bounds = array<i64: 256, 256>}, {pipeline_mode = #tpu.pipeline_mode<synchronous>, transform_indices = @transform_2, window_bounds = array<i64: 1, 256>}, {pipeline_mode = #tpu.pipeline_mode<synchronous>, transform_indices = @transform_3, window_bounds = array<i64: 256, 256>}, {pipeline_mode = #tpu.pipeline_mode<synchronous>, transform_indices = @transform_4, window_bounds = array<i64: 1, 256>}, {transform_indices = @transform_5, window_bounds = array<i64: 8, 256>}]} {
    %c0 = arith.constant 0 : index
    %c0_0 = arith.constant 0 : index
    %0 = vector.load %arg1[%c0, %c0_0] : memref<8x256xf32, #tpu.memory_space<vmem>>, vector<8x256xf32>
    %1 = arith.truncf %0 : vector<8x256xf32> to vector<8x256xbf16>
    %c0_1 = arith.constant 0 : index
    %c0_2 = arith.constant 0 : index
    %2 = vector.load %arg2[%c0_1, %c0_2] : memref<256x256xbf16, #tpu.memory_space<vmem>>, vector<256x256xbf16>
    %cst = arith.constant dense<0.000000e+00> : vector<8x256xf32>
    %3 = tpu.matmul %1, %2, %cst {dimension_numbers = #tpu.dot_dimension_numbers<[1], [0], [0], [1], [0, 0, 1, 1], [], []>} : vector<8x256xbf16>, vector<256x256xbf16>, vector<8x256xf32> -> vector<8x256xf32>
    %c0_3 = arith.constant 0 : index
    %c0_4 = arith.constant 0 : index
    %4 = vector.load %arg3[%c0_3, %c0_4] : memref<1x256xf32, #tpu.memory_space<vmem>>, vector<1x256xf32>
    %5 = vector.broadcast %4 : vector<1x256xf32> to vector<8x256xf32>
    %6 = arith.addf %3, %5 : vector<8x256xf32>
    %cst_5 = arith.constant 0.000000e+00 : f32
    %7 = vector.broadcast %cst_5 : f32 to vector<8x256xf32>
    %8 = arith.cmpf ogt, %6, %7 : vector<8x256xf32>
    %cst_6 = arith.constant 0.00999999977 : f32
    %9 = vector.broadcast %cst_6 : f32 to vector<8x256xf32>
    %10 = arith.mulf %9, %6 : vector<8x256xf32>
    %11 = arith.select %8, %6, %10 : vector<8x256xi1>, vector<8x256xf32>
    %12 = arith.truncf %11 : vector<8x256xf32> to vector<8x256xbf16>
    %c0_7 = arith.constant 0 : index
    %c0_8 = arith.constant 0 : index
    %13 = vector.load %arg4[%c0_7, %c0_8] : memref<256x256xbf16, #tpu.memory_space<vmem>>, vector<256x256xbf16>
    %cst_9 = arith.constant dense<0.000000e+00> : vector<8x256xf32>
    %14 = tpu.matmul %12, %13, %cst_9 {dimension_numbers = #tpu.dot_dimension_numbers<[1], [0], [0], [1], [0, 0, 1, 1], [], []>} : vector<8x256xbf16>, vector<256x256xbf16>, vector<8x256xf32> -> vector<8x256xf32>
    %c0_10 = arith.constant 0 : index
    %c0_11 = arith.constant 0 : index
    %15 = vector.load %arg5[%c0_10, %c0_11] : memref<1x256xf32, #tpu.memory_space<vmem>>, vector<1x256xf32>
    %16 = vector.broadcast %15 : vector<1x256xf32> to vector<8x256xf32>
    %17 = arith.addf %14, %16 : vector<8x256xf32>
    %cst_12 = arith.constant 0.000000e+00 : f32
    %18 = vector.broadcast %cst_12 : f32 to vector<8x256xf32>
    %19 = arith.cmpf ogt, %17, %18 : vector<8x256xf32>
    %cst_13 = arith.constant 0.00999999977 : f32
    %20 = vector.broadcast %cst_13 : f32 to vector<8x256xf32>
    %21 = arith.mulf %20, %17 : vector<8x256xf32>
    %22 = arith.select %19, %17, %21 : vector<8x256xi1>, vector<8x256xf32>
    %23 = arith.addf %22, %0 : vector<8x256xf32>
    %c0_14 = arith.constant 0 : index
    %c0_15 = arith.constant 0 : index
    %24 = vector.load %arg6[%c0_14, %c0_15] : memref<8x256xf32, #tpu.memory_space<vmem>>, vector<8x256xf32>
    tpu.vector_store %arg6[%c0_14, %c0_15], %23 {strides = array<i32>} : memref<8x256xf32, #tpu.memory_space<vmem>>, vector<8x256xf32>,
    return
  }
  func.func @transform_0(%arg0: i32) -> (i32, i32) {
    %c0_i32 = arith.constant 0 : i32
    %c0_i32_0 = arith.constant 0 : i32
    return %arg0, %c0_i32 : i32, i32
  }
  func.func @transform_1(%arg0: i32) -> (i32, i32) {
    %c0_i32 = arith.constant 0 : i32
    %c0_i32_0 = arith.constant 0 : i32
    %c0_i32_1 = arith.constant 0 : i32
    return %c0_i32, %c0_i32_0 : i32, i32
  }
  func.func @transform_2(%arg0: i32) -> (i32, i32) {
    %c0_i32 = arith.constant 0 : i32
    %c0_i32_0 = arith.constant 0 : i32
    %c0_i32_1 = arith.constant 0 : i32
    return %c0_i32, %c0_i32_0 : i32, i32
  }
  func.func @transform_3(%arg0: i32) -> (i32, i32) {
    %c0_i32 = arith.constant 0 : i32
    %c0_i32_0 = arith.constant 0 : i32
    %c0_i32_1 = arith.constant 0 : i32
    return %c0_i32, %c0_i32_0 : i32, i32
  }
  func.func @transform_4(%arg0: i32) -> (i32, i32) {
    %c0_i32 = arith.constant 0 : i32
    %c0_i32_0 = arith.constant 0 : i32
    %c0_i32_1 = arith.constant 0 : i32
    return %c0_i32, %c0_i32_0 : i32, i32
  }
  func.func @transform_5(%arg0: i32) -> (i32, i32) {
    %c0_i32 = arith.constant 0 : i32
    %c0_i32_0 = arith.constant 0 : i32
    return %arg0, %c0_i32 : i32, i32
  }
}

</mosaic_0001>

<llo_original>
// kernel: tpu_custom_call.1
$region0: #{tpu_custom_call.1}
  #allocation0 [shape = 'u32[]', space=smem, size = 0x4, offset = 0x4, fixed_abs, tag = 'smem constant byte address 0x4 - core index']
  #allocation1 [shape = 'u32[144,128]{1,0:T(1,128)}', space=vmem, size = 0x12000, scoped, tag = 'internal scratch']
  %s0 = inlined_call_operand.hbm [shape: f32[8,256], index: 0, kind: input, shape index: {}]
  %s1 = inlined_call_operand.hbm [shape: bf16[256,256], index: 1, kind: input, shape index: {}]
  %s2 = inlined_call_operand.vmem [shape: f32[1,256], index: 2, kind: input, shape index: {}]
  %s3 = inlined_call_operand.hbm [shape: bf16[256,256], index: 3, kind: input, shape index: {}]
  %s4 = inlined_call_operand.vmem [shape: f32[1,256], index: 4, kind: input, shape index: {}]
  %s5 = inlined_call_operand.hbm [shape: f32[8,256], index: 5, kind: output, shape index: {}]
  %s6 = sld [smem:[#allocation0]]
  $region42: #{tpu_custom_call.1} parent=0
    _
  %s8 = ssub.s32 1, %s6
  %s9 = scalar_select 0, %s8, %s6
  $region1: #{tpu_custom_call.1} parent=0
    #allocation2 [shape = 'u8[8192]{0}', space=vmem, size = 0x2000, scoped, tag = 'input window, operand 0, single buffered']
    #allocation3 [shape = 's32[1]{0}', space=sflag, size = 0x4, scoped, tag = 'scoped memory for tpu_custom_call.1']
    #allocation4 [shape = 's32[1]{0}', space=sflag, size = 0x4, scoped, tag = 'scoped memory for tpu_custom_call.1']
    #allocation5 [shape = 'u8[131072]{0}', space=vmem, size = 0x20000, scoped, tag = 'input window, operand 1, single buffered']
    #allocation6 [shape = 's32[1]{0}', space=sflag, size = 0x4, scoped, tag = 'scoped memory for tpu_custom_call.1']
    #allocation7 [shape = 'u8[131072]{0}', space=vmem, size = 0x20000, scoped, tag = 'input window, operand 3, single buffered']
    #allocation8 [shape = 'u8[8192]{0}', space=vmem, size = 0x2000, scoped, tag = 'output window, operand 0, single buffered']
    %10 = vsyncpa [#allocation3], 0
    %11 = vsyncpa [#allocation6], 0
    %12 = vsyncpa [#allocation4], 0
    // Predicated region
    $region2: #{tpu_custom_call.1} parent=1 // pred_check
      _
    $region3: #{tpu_custom_call.1} parent=1 // pred_check_branch
      %14 = sbr.rel (0) target = $region5
    $region4: #{tpu_custom_call.1} parent=1 // pred_region
      %s16 = ssub.s32 256, 256
      %17 = vsyncadd [#allocation3], %s16
      %s19 = sshll.u32 [#allocation2], 4
      %s20 = int_to_ptr.vmem [resolvable:$true] %s19
      %22 = dma.hbm_to_vmem [thread:$0]  %s0, 256, %s20, [#allocation3]
    $region5: #{tpu_custom_call.1} parent=1 // pred_fallthru
      _
    // Predicated region
    $region6: #{tpu_custom_call.1} parent=1 // pred_check
      _
    $region7: #{tpu_custom_call.1} parent=1 // pred_check_branch
      %24 = sbr.rel (0) target = $region9
    $region8: #{tpu_custom_call.1} parent=1 // pred_region
      %s26 = ssub.s32 4096, 4096
      %27 = vsyncadd [#allocation6], %s26
      %s28 = sshll.u32 [#allocation5], 4
      %s29 = int_to_ptr.vmem [resolvable:$true] %s28
      %34 = dma.hbm_to_vmem [thread:$0]  %s1, 4096, %s29, [#allocation6], 128, 128, 8
    $region9: #{tpu_custom_call.1} parent=1 // pred_fallthru
      _
    // Predicated region
    $region10: #{tpu_custom_call.1} parent=1 // pred_check
      _
    $region11: #{tpu_custom_call.1} parent=1 // pred_check_branch
      %36 = sbr.rel (0) target = $region13
    $region12: #{tpu_custom_call.1} parent=1 // pred_region
      _
    $region13: #{tpu_custom_call.1} parent=1 // pred_fallthru
      _
    // Predicated region
    $region14: #{tpu_custom_call.1} parent=1 // pred_check
      _
    $region15: #{tpu_custom_call.1} parent=1 // pred_check_branch
      %38 = sbr.rel (0) target = $region17
    $region16: #{tpu_custom_call.1} parent=1 // pred_region
      %s40 = ssub.s32 4096, 4096
      %41 = vsyncadd [#allocation6], %s40
      %s42 = sshll.u32 [#allocation7], 4
      %s43 = int_to_ptr.vmem [resolvable:$true] %s42
      %48 = dma.hbm_to_vmem [thread:$0]  %s3, 4096, %s43, [#allocation6], 128, 128, 8
    $region17: #{tpu_custom_call.1} parent=1 // pred_fallthru
      _
    // Predicated region
    $region18: #{tpu_custom_call.1} parent=1 // pred_check
      _
    $region19: #{tpu_custom_call.1} parent=1 // pred_check_branch
      %50 = sbr.rel (0) target = $region21
    $region20: #{tpu_custom_call.1} parent=1 // pred_region
      _
    $region21: #{tpu_custom_call.1} parent=1 // pred_fallthru
      _
    // Predicated region
    $region22: #{tpu_custom_call.1} parent=1 // pred_check
      _
    $region23: #{tpu_custom_call.1} parent=1 // pred_check_branch
      %52 = sbr.rel (0) target = $region25
    $region24: #{tpu_custom_call.1} parent=1 // pred_region
      %53 = dma.done [#allocation3], 256
    $region25: #{tpu_custom_call.1} parent=1 // pred_fallthru
      _
    // Predicated region
    $region26: #{tpu_custom_call.1} parent=1 // pred_check
      _
    $region27: #{tpu_custom_call.1} parent=1 // pred_check_branch
      %55 = sbr.rel (0) target = $region29
    $region28: #{tpu_custom_call.1} parent=1 // pred_region
      %56 = dma.done [#allocation6], 4096
    $region29: #{tpu_custom_call.1} parent=1 // pred_fallthru
      _
    // Predicated region
    $region30: #{tpu_custom_call.1} parent=1 // pred_check
      _
    $region31: #{tpu_custom_call.1} parent=1 // pred_check_branch
      %58 = sbr.rel (0) target = $region33
    $region32: #{tpu_custom_call.1} parent=1 // pred_region
      %59 = dma.done [#allocation6], 4096
    $region33: #{tpu_custom_call.1} parent=1 // pred_fallthru
      _
    %v60 = vld [vmem:[#allocation2] sm:$0xff]
    %v61 = vld [vmem:[#allocation2 + $0x8] sm:$0xff]
    %v62 = vpack.c.bf16 %v60, %v60
    %v63 = vpack.c.bf16 %v61, %v61
    %v64 = vld [vmem:[#allocation5] sm:$0xff]
    %v65 = vld [vmem:[#allocation5 + $0x8] sm:$0xff]
    %v66 = vld [vmem:[#allocation5 + $0x10] sm:$0xff]
    %v67 = vld [vmem:[#allocation5 + $0x18] sm:$0xff]
    %v68 = vld [vmem:[#allocation5 + $0x20] sm:$0xff]
    %v69 = vld [vmem:[#allocation5 + $0x28] sm:$0xff]
    %v70 = vld [vmem:[#allocation5 + $0x30] sm:$0xff]
    %v71 = vld [vmem:[#allocation5 + $0x38] sm:$0xff]
    %v72 = vld [vmem:[#allocation5 + $0x40] sm:$0xff]
    %v73 = vld [vmem:[#allocation5 + $0x48] sm:$0xff]
    %v74 = vld [vmem:[#allocation5 + $0x50] sm:$0xff]
    %v75 = vld [vmem:[#allocation5 + $0x58] sm:$0xff]
    %v76 = vld [vmem:[#allocation5 + $0x60] sm:$0xff]
    %v77 = vld [vmem:[#allocation5 + $0x68] sm:$0xff]
    %v78 = vld [vmem:[#allocation5 + $0x70] sm:$0xff]
    %v79 = vld [vmem:[#allocation5 + $0x78] sm:$0xff]
    %v80 = vld [vmem:[#allocation5 + $0x80] sm:$0xff]
    %v81 = vld [vmem:[#allocation5 + $0x88] sm:$0xff]
    %v82 = vld [vmem:[#allocation5 + $0x90] sm:$0xff]
    %v83 = vld [vmem:[#allocation5 + $0x98] sm:$0xff]
    %v84 = vld [vmem:[#allocation5 + $0xa0] sm:$0xff]
    %v85 = vld [vmem:[#allocation5 + $0xa8] sm:$0xff]
    %v86 = vld [vmem:[#allocation5 + $0xb0] sm:$0xff]
    %v87 = vld [vmem:[#allocation5 + $0xb8] sm:$0xff]
    %v88 = vld [vmem:[#allocation5 + $0xc0] sm:$0xff]
    %v89 = vld [vmem:[#allocation5 + $0xc8] sm:$0xff]
    %v90 = vld [vmem:[#allocation5 + $0xd0] sm:$0xff]
    %v91 = vld [vmem:[#allocation5 + $0xd8] sm:$0xff]
    %v92 = vld [vmem:[#allocation5 + $0xe0] sm:$0xff]
    %v93 = vld [vmem:[#allocation5 + $0xe8] sm:$0xff]
    %v94 = vld [vmem:[#allocation5 + $0xf0] sm:$0xff]
    %v95 = vld [vmem:[#allocation5 + $0xf8] sm:$0xff]
    %v96 = vld [vmem:[%s2] sm:$0x3]
    %v98 = vlaneseq
    %v99 = vshrl.u32 %v98, 7
    %v100 = vsub.s32 0, %v99
    %v101 = vrot.slane %v96, %v100
    %v102 = vlaneseq
    %v103 = vshrl.u32 %v102, 7
    %v104 = vsub.s32 1, %v103
    %v105 = vrot.slane %v96, %v104
    %v140 = vunpack.c.l.b16 %v64
    %v141 = vunpack.c.h.b16 %v64
    %v142 = vunpack.c.l.b16 %v65
    %v143 = vunpack.c.h.b16 %v65
    %v144 = vunpack.c.l.b16 %v66
    %v145 = vunpack.c.h.b16 %v66
    %v146 = vunpack.c.l.b16 %v67
    %v147 = vunpack.c.h.b16 %v67
    %v148 = vunpack.c.l.b16 %v68
    %v149 = vunpack.c.h.b16 %v68
    %v150 = vunpack.c.l.b16 %v69
    %v151 = vunpack.c.h.b16 %v69
    %v152 = vunpack.c.l.b16 %v70
    %v153 = vunpack.c.h.b16 %v70
    %v154 = vunpack.c.l.b16 %v71
    %v155 = vunpack.c.h.b16 %v71
    %v156 = vunpack.c.l.b16 %v72
    %v157 = vunpack.c.h.b16 %v72
    %v158 = vunpack.c.l.b16 %v73
    %v159 = vunpack.c.h.b16 %v73
    %v160 = vunpack.c.l.b16 %v74
    %v161 = vunpack.c.h.b16 %v74
    %v162 = vunpack.c.l.b16 %v75
    %v163 = vunpack.c.h.b16 %v75
    %v164 = vunpack.c.l.b16 %v76
    %v165 = vunpack.c.h.b16 %v76
    %v166 = vunpack.c.l.b16 %v77
    %v167 = vunpack.c.h.b16 %v77
    %v168 = vunpack.c.l.b16 %v78
    %v169 = vunpack.c.h.b16 %v78
    %v170 = vunpack.c.l.b16 %v79
    %v171 = vunpack.c.h.b16 %v79
    %v172 = vunpack.c.l.b16 %v80
    %v173 = vunpack.c.h.b16 %v80
    %v174 = vunpack.c.l.b16 %v81
    %v175 = vunpack.c.h.b16 %v81
    %v176 = vunpack.c.l.b16 %v82
    %v177 = vunpack.c.h.b16 %v82
    %v178 = vunpack.c.l.b16 %v83
    %v179 = vunpack.c.h.b16 %v83
    %v180 = vunpack.c.l.b16 %v84
    %v181 = vunpack.c.h.b16 %v84
    %v182 = vunpack.c.l.b16 %v85
    %v183 = vunpack.c.h.b16 %v85
    %v184 = vunpack.c.l.b16 %v86
    %v185 = vunpack.c.h.b16 %v86
    %v186 = vunpack.c.l.b16 %v87
    %v187 = vunpack.c.h.b16 %v87
    %v188 = vunpack.c.l.b16 %v88
    %v189 = vunpack.c.h.b16 %v88
    %v190 = vunpack.c.l.b16 %v89
    %v191 = vunpack.c.h.b16 %v89
    %v192 = vunpack.c.l.b16 %v90
    %v193 = vunpack.c.h.b16 %v90
    %v194 = vunpack.c.l.b16 %v91
    %v195 = vunpack.c.h.b16 %v91
    %v196 = vunpack.c.l.b16 %v92
    %v197 = vunpack.c.h.b16 %v92
    %v198 = vunpack.c.l.b16 %v93
    %v199 = vunpack.c.h.b16 %v93
    %v200 = vunpack.c.l.b16 %v94
    %v201 = vunpack.c.h.b16 %v94
    %v202 = vunpack.c.l.b16 %v95
    %v203 = vunpack.c.h.b16 %v95
    %v204 = vpack.c.b16 %v142, %v140
    %v205 = vpack.c.b16 %v143, %v141
    %v206 = vpack.c.b16 %v146, %v144
    %v207 = vpack.c.b16 %v147, %v145
    %v208 = vpack.c.b16 %v150, %v148
    %v209 = vpack.c.b16 %v151, %v149
    %v210 = vpack.c.b16 %v154, %v152
    %v211 = vpack.c.b16 %v155, %v153
    %v212 = vpack.c.b16 %v158, %v156
    %v213 = vpack.c.b16 %v159, %v157
    %v214 = vpack.c.b16 %v162, %v160
    %v215 = vpack.c.b16 %v163, %v161
    %v216 = vpack.c.b16 %v166, %v164
    %v217 = vpack.c.b16 %v167, %v165
    %v218 = vpack.c.b16 %v170, %v168
    %v219 = vpack.c.b16 %v171, %v169
    %v220 = vpack.c.b16 %v174, %v172
    %v221 = vpack.c.b16 %v175, %v173
    %v222 = vpack.c.b16 %v178, %v176
    %v223 = vpack.c.b16 %v179, %v177
    %v224 = vpack.c.b16 %v182, %v180
    %v225 = vpack.c.b16 %v183, %v181
    %v226 = vpack.c.b16 %v186, %v184
    %v227 = vpack.c.b16 %v187, %v185
    %v228 = vpack.c.b16 %v190, %v188
    %v229 = vpack.c.b16 %v191, %v189
    %v230 = vpack.c.b16 %v194, %v192
    %v231 = vpack.c.b16 %v195, %v193
    %v232 = vpack.c.b16 %v198, %v196
    %v233 = vpack.c.b16 %v199, %v197
    %v234 = vpack.c.b16 %v202, %v200
    %v235 = vpack.c.b16 %v203, %v201
    %268 = vmatprep.subr.bf16.mxu0 %v219
    %269 = vmatpush1.bf16.msra.mxu0 %v218
    %270 = vmatprep.subr.bf16.mxu0 %v217
    %271 = vmatpush1.bf16.msra.mxu0 %v216
    %272 = vmatprep.subr.bf16.mxu0 %v215
    %273 = vmatpush1.bf16.msra.mxu0 %v214
    %274 = vmatprep.subr.bf16.mxu0 %v213
    %275 = vmatpush1.bf16.msra.mxu0 %v212
    %276 = vmatprep.subr.bf16.mxu0 %v211
    %277 = vmatpush1.bf16.msra.mxu0 %v210
    %278 = vmatprep.subr.bf16.mxu0 %v209
    %279 = vmatpush1.bf16.msra.mxu0 %v208
    %280 = vmatprep.subr.bf16.mxu0 %v207
    %281 = vmatpush1.bf16.msra.mxu0 %v206
    %282 = vmatprep.subr.bf16.mxu0 %v205
    %283 = vmatpush1.bf16.msra.mxu0 %v204
    %284 = vmatprep.subr.bf16.mxu0 %v235
    %285 = vmatpush2.bf16.msra.mxu0 %v234
    %286 = vmatprep.subr.bf16.mxu0 %v233
    %287 = vmatpush2.bf16.msra.mxu0 %v232
    %288 = vmatprep.subr.bf16.mxu0 %v231
    %289 = vmatpush2.bf16.msra.mxu0 %v230
    %290 = vmatprep.subr.bf16.mxu0 %v229
    %291 = vmatpush2.bf16.msra.mxu0 %v228
    %292 = vmatprep.subr.bf16.mxu0 %v227
    %293 = vmatpush2.bf16.msra.mxu0 %v226
    %294 = vmatprep.subr.bf16.mxu0 %v225
    %295 = vmatpush2.bf16.msra.mxu0 %v224
    %296 = vmatprep.subr.bf16.mxu0 %v223
    %297 = vmatpush2.bf16.msra.mxu0 %v222
    %298 = vmatprep.subr.bf16.mxu0 %v221
    %299 = vmatpush2.bf16.msra.mxu0 %v220
    %300 = vmatprep.mubr.bf16.mxu0 %v63
    %301 = vmatmul.mubr.bf16.gmra.mxu0 %v62
    %v302 = vpop.f32.mrf.mxu0
    %v303 = vadd.f32 %v101, %v302
    %v304 = vpop.f32.mrf.mxu0
    %v305 = vadd.f32 %v105, %v304
    %v306 = vpop.f32.mrf.mxu0
    %v307 = vpop.f32.mrf.mxu0
    %308 = vdwg.mxu0
    %vm309 = vcmp.gt.f32.partialorder %v303, 0.0
    %vm310 = vcmp.gt.f32.partialorder %v305, 0.0
    %v311 = vmul.f32 %v303, 0.01
    %v312 = vmul.f32 %v305, 0.01
    %v313 = vsel %vm309, %v303, %v311
    %v314 = vsel %vm310, %v305, %v312
    %v315 = vpack.c.bf16 %v313, %v313
    %v316 = vpack.c.bf16 %v314, %v314
    %v317 = vld [vmem:[#allocation7] sm:$0xff]
    %v318 = vld [vmem:[#allocation7 + $0x8] sm:$0xff]
    %v319 = vld [vmem:[#allocation7 + $0x10] sm:$0xff]
    %v320 = vld [vmem:[#allocation7 + $0x18] sm:$0xff]
    %v321 = vld [vmem:[#allocation7 + $0x20] sm:$0xff]
    %v322 = vld [vmem:[#allocation7 + $0x28] sm:$0xff]
    %v323 = vld [vmem:[#allocation7 + $0x30] sm:$0xff]
    %v324 = vld [vmem:[#allocation7 + $0x38] sm:$0xff]
    %v325 = vld [vmem:[#allocation7 + $0x40] sm:$0xff]
    %v326 = vld [vmem:[#allocation7 + $0x48] sm:$0xff]
    %v327 = vld [vmem:[#allocation7 + $0x50] sm:$0xff]
    %v328 = vld [vmem:[#allocation7 + $0x58] sm:$0xff]
    %v329 = vld [vmem:[#allocation7 + $0x60] sm:$0xff]
    %v330 = vld [vmem:[#allocation7 + $0x68] sm:$0xff]
    %v331 = vld [vmem:[#allocation7 + $0x70] sm:$0xff]
    %v332 = vld [vmem:[#allocation7 + $0x78] sm:$0xff]
    %v333 = vld [vmem:[#allocation7 + $0x80] sm:$0xff]
    %v334 = vld [vmem:[#allocation7 + $0x88] sm:$0xff]
    %v335 = vld [vmem:[#allocation7 + $0x90] sm:$0xff]
    %v336 = vld [vmem:[#allocation7 + $0x98] sm:$0xff]
    %v337 = vld [vmem:[#allocation7 + $0xa0] sm:$0xff]
    %v338 = vld [vmem:[#allocation7 + $0xa8] sm:$0xff]
    %v339 = vld [vmem:[#allocation7 + $0xb0] sm:$0xff]
    %v340 = vld [vmem:[#allocation7 + $0xb8] sm:$0xff]
    %v341 = vld [vmem:[#allocation7 + $0xc0] sm:$0xff]
    %v342 = vld [vmem:[#allocation7 + $0xc8] sm:$0xff]
    %v343 = vld [vmem:[#allocation7 + $0xd0] sm:$0xff]
    %v344 = vld [vmem:[#allocation7 + $0xd8] sm:$0xff]
    %v345 = vld [vmem:[#allocation7 + $0xe0] sm:$0xff]
    %v346 = vld [vmem:[#allocation7 + $0xe8] sm:$0xff]
    %v347 = vld [vmem:[#allocation7 + $0xf0] sm:$0xff]
    %v348 = vld [vmem:[#allocation7 + $0xf8] sm:$0xff]
    %v349 = vld [vmem:[%s4] sm:$0x3]
    %v351 = vlaneseq
    %v352 = vshrl.u32 %v351, 7
    %v353 = vsub.s32 0, %v352
    %v354 = vrot.slane %v349, %v353
    %v355 = vlaneseq
    %v356 = vshrl.u32 %v355, 7
    %v357 = vsub.s32 1, %v356
    %v358 = vrot.slane %v349, %v357
    %v393 = vunpack.c.l.b16 %v317
    %v394 = vunpack.c.h.b16 %v317
    %v395 = vunpack.c.l.b16 %v318
    %v396 = vunpack.c.h.b16 %v318
    %v397 = vunpack.c.l.b16 %v319
    %v398 = vunpack.c.h.b16 %v319
    %v399 = vunpack.c.l.b16 %v320
    %v400 = vunpack.c.h.b16 %v320
    %v401 = vunpack.c.l.b16 %v321
    %v402 = vunpack.c.h.b16 %v321
    %v403 = vunpack.c.l.b16 %v322
    %v404 = vunpack.c.h.b16 %v322
    %v405 = vunpack.c.l.b16 %v323
    %v406 = vunpack.c.h.b16 %v323
    %v407 = vunpack.c.l.b16 %v324
    %v408 = vunpack.c.h.b16 %v324
    %v409 = vunpack.c.l.b16 %v325
    %v410 = vunpack.c.h.b16 %v325
    %v411 = vunpack.c.l.b16 %v326
    %v412 = vunpack.c.h.b16 %v326
    %v413 = vunpack.c.l.b16 %v327
    %v414 = vunpack.c.h.b16 %v327
    %v415 = vunpack.c.l.b16 %v328
    %v416 = vunpack.c.h.b16 %v328
    %v417 = vunpack.c.l.b16 %v329
    %v418 = vunpack.c.h.b16 %v329
    %v419 = vunpack.c.l.b16 %v330
    %v420 = vunpack.c.h.b16 %v330
    %v421 = vunpack.c.l.b16 %v331
    %v422 = vunpack.c.h.b16 %v331
    %v423 = vunpack.c.l.b16 %v332
    %v424 = vunpack.c.h.b16 %v332
    %v425 = vunpack.c.l.b16 %v333
    %v426 = vunpack.c.h.b16 %v333
    %v427 = vunpack.c.l.b16 %v334
    %v428 = vunpack.c.h.b16 %v334
    %v429 = vunpack.c.l.b16 %v335
    %v430 = vunpack.c.h.b16 %v335
    %v431 = vunpack.c.l.b16 %v336
    %v432 = vunpack.c.h.b16 %v336
    %v433 = vunpack.c.l.b16 %v337
    %v434 = vunpack.c.h.b16 %v337
    %v435 = vunpack.c.l.b16 %v338
    %v436 = vunpack.c.h.b16 %v338
    %v437 = vunpack.c.l.b16 %v339
    %v438 = vunpack.c.h.b16 %v339
    %v439 = vunpack.c.l.b16 %v340
    %v440 = vunpack.c.h.b16 %v340
    %v441 = vunpack.c.l.b16 %v341
    %v442 = vunpack.c.h.b16 %v341
    %v443 = vunpack.c.l.b16 %v342
    %v444 = vunpack.c.h.b16 %v342
    %v445 = vunpack.c.l.b16 %v343
    %v446 = vunpack.c.h.b16 %v343
    %v447 = vunpack.c.l.b16 %v344
    %v448 = vunpack.c.h.b16 %v344
    %v449 = vunpack.c.l.b16 %v345
    %v450 = vunpack.c.h.b16 %v345
    %v451 = vunpack.c.l.b16 %v346
    %v452 = vunpack.c.h.b16 %v346
    %v453 = vunpack.c.l.b16 %v347
    %v454 = vunpack.c.h.b16 %v347
    %v455 = vunpack.c.l.b16 %v348
    %v456 = vunpack.c.h.b16 %v348
    %v457 = vpack.c.b16 %v395, %v393
    %v458 = vpack.c.b16 %v396, %v394
    %v459 = vpack.c.b16 %v399, %v397
    %v460 = vpack.c.b16 %v400, %v398
    %v461 = vpack.c.b16 %v403, %v401
    %v462 = vpack.c.b16 %v404, %v402
    %v463 = vpack.c.b16 %v407, %v405
    %v464 = vpack.c.b16 %v408, %v406
    %v465 = vpack.c.b16 %v411, %v409
    %v466 = vpack.c.b16 %v412, %v410
    %v467 = vpack.c.b16 %v415, %v413
    %v468 = vpack.c.b16 %v416, %v414
    %v469 = vpack.c.b16 %v419, %v417
    %v470 = vpack.c.b16 %v420, %v418
    %v471 = vpack.c.b16 %v423, %v421
    %v472 = vpack.c.b16 %v424, %v422
    %v473 = vpack.c.b16 %v427, %v425
    %v474 = vpack.c.b16 %v428, %v426
    %v475 = vpack.c.b16 %v431, %v429
    %v476 = vpack.c.b16 %v432, %v430
    %v477 = vpack.c.b16 %v435, %v433
    %v478 = vpack.c.b16 %v436, %v434
    %v479 = vpack.c.b16 %v439, %v437
    %v480 = vpack.c.b16 %v440, %v438
    %v481 = vpack.c.b16 %v443, %v441
    %v482 = vpack.c.b16 %v444, %v442
    %v483 = vpack.c.b16 %v447, %v445
    %v484 = vpack.c.b16 %v448, %v446
    %v485 = vpack.c.b16 %v451, %v449
    %v486 = vpack.c.b16 %v452, %v450
    %v487 = vpack.c.b16 %v455, %v453
    %v488 = vpack.c.b16 %v456, %v454
    %521 = vmatprep.subr.bf16.mxu0 %v472
    %522 = vmatpush1.bf16.msra.mxu0 %v471
    %523 = vmatprep.subr.bf16.mxu0 %v470
    %524 = vmatpush1.bf16.msra.mxu0 %v469
    %525 = vmatprep.subr.bf16.mxu0 %v468
    %526 = vmatpush1.bf16.msra.mxu0 %v467
    %527 = vmatprep.subr.bf16.mxu0 %v466
    %528 = vmatpush1.bf16.msra.mxu0 %v465
    %529 = vmatprep.subr.bf16.mxu0 %v464
    %530 = vmatpush1.bf16.msra.mxu0 %v463
    %531 = vmatprep.subr.bf16.mxu0 %v462
    %532 = vmatpush1.bf16.msra.mxu0 %v461
    %533 = vmatprep.subr.bf16.mxu0 %v460
    %534 = vmatpush1.bf16.msra.mxu0 %v459
    %535 = vmatprep.subr.bf16.mxu0 %v458
    %536 = vmatpush1.bf16.msra.mxu0 %v457
    %537 = vmatprep.subr.bf16.mxu0 %v488
    %538 = vmatpush2.bf16.msra.mxu0 %v487
    %539 = vmatprep.subr.bf16.mxu0 %v486
    %540 = vmatpush2.bf16.msra.mxu0 %v485
    %541 = vmatprep.subr.bf16.mxu0 %v484
    %542 = vmatpush2.bf16.msra.mxu0 %v483
    %543 = vmatprep.subr.bf16.mxu0 %v482
    %544 = vmatpush2.bf16.msra.mxu0 %v481
    %545 = vmatprep.subr.bf16.mxu0 %v480
    %546 = vmatpush2.bf16.msra.mxu0 %v479
    %547 = vmatprep.subr.bf16.mxu0 %v478
    %548 = vmatpush2.bf16.msra.mxu0 %v477
    %549 = vmatprep.subr.bf16.mxu0 %v476
    %550 = vmatpush2.bf16.msra.mxu0 %v475
    %551 = vmatprep.subr.bf16.mxu0 %v474
    %552 = vmatpush2.bf16.msra.mxu0 %v473
    %553 = vmatprep.mubr.bf16.mxu0 %v316
    %554 = vmatmul.mubr.bf16.gmra.mxu0 %v315
    %v555 = vpop.f32.mrf.mxu0
    %v556 = vadd.f32 %v354, %v555
    %v557 = vpop.f32.mrf.mxu0
    %v558 = vadd.f32 %v358, %v557
    %v559 = vpop.f32.mrf.mxu0
    %v560 = vpop.f32.mrf.mxu0
    %561 = vdwg.mxu0
    %vm562 = vcmp.gt.f32.partialorder %v556, 0.0
    %vm563 = vcmp.gt.f32.partialorder %v558, 0.0
    %v564 = vmul.f32 %v556, 0.01
    %v565 = vmul.f32 %v558, 0.01
    %v566 = vsel %vm562, %v556, %v564
    %v567 = vsel %vm563, %v558, %v565
    %v568 = vadd.f32 %v566, %v60
    %v569 = vadd.f32 %v567, %v61
    %570 = vst [vmem:[#allocation8] sm:$0xff] %v568
    %571 = vst [vmem:[#allocation8 + $0x8] sm:$0xff] %v569
    // Predicated region
    $region34: #{tpu_custom_call.1} parent=1 // pred_check
      _
    $region35: #{tpu_custom_call.1} parent=1 // pred_check_branch
      %573 = sbr.rel (0) target = $region37
    $region36: #{tpu_custom_call.1} parent=1 // pred_region
      %s575 = ssub.s32 256, 256
      %576 = vsyncadd [#allocation4], %s575
      %s578 = sshll.u32 [#allocation8], 4
      %s579 = int_to_ptr.vmem [resolvable:$true] %s578
      %581 = dma.vmem_to_hbm [thread:$0]  %s579, 256, %s5, [#allocation4]
    $region37: #{tpu_custom_call.1} parent=1 // pred_fallthru
      _
    // Predicated region
    $region38: #{tpu_custom_call.1} parent=1 // pred_check
      _
    $region39: #{tpu_custom_call.1} parent=1 // pred_check_branch
      %583 = sbr.rel (0) target = $region41
    $region40: #{tpu_custom_call.1} parent=1 // pred_region
      %584 = dma.done [#allocation4], 256
    $region41: #{tpu_custom_call.1} parent=1 // pred_fallthru
      _
    %585 = vsyncpa [#allocation3], 1
    %586 = vsyncpa [#allocation6], 1
    %587 = vsyncpa [#allocation4], 1

</llo_original>
